<compile_context>
chip_gen: v5e
topology: v5e:2x2
jax: 0.10.0
libtpu: 0.0.40
codegen_flags: <defaults>
</compile_context>

<pallas_src>
import jax
import jax.numpy as jnp
from jax.experimental import pallas as pl
from jax.experimental.pallas import tpu as pltpu


def masked_l1_loss(pred, gt, mask, *, group=128, tile_rows=1024, num_parts=2):
    assert pred.shape == gt.shape
    assert mask.shape == pred.shape[:-1]

    C = pred.shape[-1]
    M = 1
    for dim in pred.shape[:-1]:
        M *= dim
    G = group
    L = G * C                                  # lanes per row; multiple of 128 for any C

    p_flat = pred.reshape(-1)
    g_flat = gt.reshape(-1)
    w_flat = jnp.logical_not(mask).reshape(-1).astype(jnp.int8)   # 1 = selected (~mask)

    pad_m = (-M) % G
    if pad_m:
        # Rare slow path: prod(shape[:-1]) not a multiple of `group` costs one extra
        # copy of pred/gt. Aligned shapes (the common case) take the zero-copy path.
        p_flat = jnp.pad(p_flat, (0, pad_m * C))
        g_flat = jnp.pad(g_flat, (0, pad_m * C))
        w_flat = jnp.pad(w_flat, (0, pad_m))
    rows = (M + pad_m) // G

    p2 = p_flat.reshape(rows, L)               # lane-dense view (no copy when aligned)
    g2 = g_flat.reshape(rows, L)
    w2 = w_flat.reshape(rows, G)               # int8 weight at mask granularity

    # ~2 MiB per pred/gt input block -> (2 inputs x double buffering) ~ 8 MiB VMEM,
    # plus one f32 accumulator block -> comfortably inside the default scoped VMEM.
    itemsize = pred.dtype.itemsize
    tile_rows = min(tile_rows, max(8, (2 * 1024 * 1024) // (L * itemsize)))
    tile_rows = min(tile_rows, rows)
    if tile_rows < rows and tile_rows % 8:
        tile_rows = max(8, (tile_rows // 8) * 8)   # (8,128) block constraint

    nblocks = pl.cdiv(rows, tile_rows)
    P = max(1, min(num_parts, nblocks))        # leading "parallel" axis (megacore)
    S = pl.cdiv(nblocks, P)                    # sequential steps per part

    # 0/1 selector: sel[g, j] = 1 iff j // C == g.  Expanding the per-mask-entry
    # weight to per-element granularity with this matmul is exact (0/1 operands).
    sel = (jnp.arange(L, dtype=jnp.int32)[None, :] // C
           == jnp.arange(G, dtype=jnp.int32)[:, None]).astype(jnp.bfloat16)   # (G, L)

    def kernel(p_ref, g_ref, w_ref, sel_ref, sum_ref, cnt_ref, acc_sum, acc_cnt):
        part = pl.program_id(0)
        step = pl.program_id(1)

        @pl.when(step == 0)
        def _():
            acc_sum[...] = jnp.zeros_like(acc_sum)
            acc_cnt[...] = jnp.zeros_like(acc_cnt)

        # Row-validity mask for partial / clamped tail blocks (index-based, so OOB
        # garbage in the loaded data can never poison the sums).
        blk = part * S + step
        row_ids = blk * tile_rows + jax.lax.broadcasted_iota(
            jnp.int32, (tile_rows, 1), 0)
        valid = row_ids < rows                                        # (TM, 1)

        pf = p_ref[...].astype(jnp.float32)                           # (TM, L)
        gf = g_ref[...].astype(jnp.float32)
        d = jnp.where(valid, jnp.abs(pf - gf), 0.0)                   # garbage -> 0

        w = jnp.where(valid, w_ref[...].astype(jnp.float32), 0.0)     # (TM, G) 0/1
        # Expand weight to element granularity on the (otherwise idle) MXU.
        w_exp = jnp.dot(w.astype(jnp.bfloat16), sel_ref[...],
                        preferred_element_type=jnp.float32)           # (TM, L)

        acc_sum[...] += d * w_exp                                     # pure VPU
        acc_cnt[...] += w

        @pl.when(step == S - 1)
        def _():
            # One sublane reduce per part; cross-lane finish happens in the wrapper.
            sum_ref[...] = jnp.sum(acc_sum[...], axis=0).reshape(1, 1, L)
            cnt_ref[...] = jnp.sum(acc_cnt[...], axis=0).reshape(1, 1, G)

    def in_map(p, s):
        # Clamp tail blocks of the last part so DMAs always stay in bounds; the
        # in-kernel validity mask zeroes their contribution.
        return (jnp.minimum(p * S + s, nblocks - 1), 0)

    s_parts, c_parts = pl.pallas_call(
        kernel,
        out_shape=(jax.ShapeDtypeStruct((P, 1, L), jnp.float32),
                   jax.ShapeDtypeStruct((P, 1, G), jnp.float32)),
        grid_spec=pltpu.PrefetchScalarGridSpec(
            num_scalar_prefetch=0,
            grid=(P, S),
            in_specs=[
                pl.BlockSpec((tile_rows, L), in_map),
                pl.BlockSpec((tile_rows, L), in_map),
                pl.BlockSpec((tile_rows, G), in_map),
                pl.BlockSpec((G, L), lambda p, s: (0, 0)),   # constant: fetched once
            ],
            out_specs=[
                pl.BlockSpec((1, 1, L), lambda p, s: (p, 0, 0)),
                pl.BlockSpec((1, 1, G), lambda p, s: (p, 0, 0)),
            ],
            scratch_shapes=[
                pltpu.VMEM((tile_rows, L), jnp.float32),
                pltpu.VMEM((tile_rows, G), jnp.float32),
            ],
        ),
        compiler_params=pltpu.CompilerParams(
            dimension_semantics=("parallel", "arbitrary")),
        cost_estimate=pl.CostEstimate(
            flops=3 * M * C,
            transcendentals=0,
            bytes_accessed=2 * M * C * itemsize + M + G * L * 2),
    )(p2, g2, w2, sel)

    total = jnp.sum(s_parts)
    count = jnp.sum(c_parts) * C        # selected elements = C * selected mask entries
    # 0/0 -> NaN matches torch's mean over an empty masked_select.
    return total / count


if __name__ == "__main__":
    key = jax.random.PRNGKey(0)
    k1, k2, k3 = jax.random.split(key, 3)

    # pred/gt: (B, H, W, C); mask: (B, H, W) boolean (stacked over C inside the loss)
    pred = jax.random.normal(k1, (2, 16, 16, 4), dtype=jnp.float32)
    gt = jax.random.normal(k2, (2, 16, 16, 4), dtype=jnp.float32)
    mask = jax.random.bernoulli(k3, 0.3, (2, 16, 16))

    loss = masked_l1_loss(pred, gt, mask)
    loss = jax.block_until_ready(loss)

    # pure-JAX reference for sanity
    w = (~mask)[..., None].astype(jnp.float32)
    ref = jnp.sum(jnp.abs(pred - gt) * w) / (jnp.sum(w) * pred.shape[-1])
    assert jnp.allclose(loss, ref, rtol=1e-5, atol=1e-6), (loss, ref)

    print("KERNEL_OK")
</pallas_src>

<mosaic_0001>
module attributes {stable_mosaic.version = 11 : i64} {
  func.func @kernel(%arg0: i32, %arg1: i32, %arg2: memref<4x512xf32, #tpu.memory_space<vmem>>, %arg3: memref<4x512xf32, #tpu.memory_space<vmem>>, %arg4: memref<4x128xi8, #tpu.memory_space<vmem>>, %arg5: memref<128x512xbf16, #tpu.memory_space<vmem>>, %arg6: memref<1x1x512xf32, #tpu.memory_space<vmem>>, %arg7: memref<1x1x128xf32, #tpu.memory_space<vmem>>, %arg8: memref<4x512xf32, #tpu.memory_space<vmem>>, %arg9: memref<4x128xf32, #tpu.memory_space<vmem>>) attributes {dimension_semantics = [#tpu.dimension_semantics<parallel>, #tpu.dimension_semantics<arbitrary>], iteration_bounds = array<i64: 1, 1>, scalar_prefetch = 0 : i64, scratch_operands = 2 : i64, tpu.core_type = #tpu.core_type<tc>, window_params = [{transform_indices = @transform_0, window_bounds = array<i64: 4, 512>}, {transform_indices = @transform_1, window_bounds = array<i64: 4, 512>}, {transform_indices = @transform_2, window_bounds = array<i64: 4, 128>}, {pipeline_mode = #tpu.pipeline_mode<synchronous>, transform_indices = @transform_3, window_bounds = array<i64: 128, 512>}, {transform_indices = @transform_4, window_bounds = array<i64: 1, 1, 512>}, {transform_indices = @transform_5, window_bounds = array<i64: 1, 1, 128>}]} {
    %c0_i32 = arith.constant 0 : i32
    %0 = arith.cmpi eq, %arg1, %c0_i32 : i32
    %1 = arith.extui %0 : i1 to i32
    %c0_i32_0 = arith.constant 0 : i32
    %2 = arith.cmpi ne, %1, %c0_i32_0 : i32
    scf.if %2 {
      %cst_21 = arith.constant 0.000000e+00 : f32
      %38 = vector.broadcast %cst_21 : f32 to vector<4x512xf32>
      %c0_22 = arith.constant 0 : index
      %c0_23 = arith.constant 0 : index
      %39 = vector.load %arg8[%c0_22, %c0_23] : memref<4x512xf32, #tpu.memory_space<vmem>>, vector<4x512xf32>
      tpu.vector_store %arg8[%c0_22, %c0_23], %38 {strides = array<i32>} : memref<4x512xf32, #tpu.memory_space<vmem>>, vector<4x512xf32>,
      %cst_24 = arith.constant 0.000000e+00 : f32
      %40 = vector.broadcast %cst_24 : f32 to vector<4x128xf32>
      %c0_25 = arith.constant 0 : index
      %c0_26 = arith.constant 0 : index
      %41 = vector.load %arg9[%c0_25, %c0_26] : memref<4x128xf32, #tpu.memory_space<vmem>>, vector<4x128xf32>
      tpu.vector_store %arg9[%c0_25, %c0_26], %40 {strides = array<i32>} : memref<4x128xf32, #tpu.memory_space<vmem>>, vector<4x128xf32>,
    } else {
    }
    %c1_i32 = arith.constant 1 : i32
    %3 = arith.muli %arg0, %c1_i32 : i32
    %4 = arith.addi %3, %arg1 : i32
    %c4_i32 = arith.constant 4 : i32
    %5 = arith.muli %4, %c4_i32 : i32
    %6 = tpu.iota {dimensions = array<i32: 0>} : vector<4x1xi32>
    %7 = vector.broadcast %5 : i32 to vector<4x1xi32>
    %8 = arith.addi %7, %6 : vector<4x1xi32>
    %c4_i32_1 = arith.constant 4 : i32
    %9 = vector.broadcast %c4_i32_1 : i32 to vector<4x1xi32>
    %10 = arith.cmpi slt, %8, %9 : vector<4x1xi32>
    %c0 = arith.constant 0 : index
    %c0_2 = arith.constant 0 : index
    %11 = vector.load %arg2[%c0, %c0_2] : memref<4x512xf32, #tpu.memory_space<vmem>>, vector<4x512xf32>
    %c0_3 = arith.constant 0 : index
    %c0_4 = arith.constant 0 : index
    %12 = vector.load %arg3[%c0_3, %c0_4] : memref<4x512xf32, #tpu.memory_space<vmem>>, vector<4x512xf32>
    %13 = arith.subf %11, %12 : vector<4x512xf32>
    %14 = math.absf %13 : vector<4x512xf32>
    %cst = arith.constant 0.000000e+00 : f32
    %15 = vector.shape_cast %10 : vector<4x1xi1> to vector<4x1xi1>
    %16 = vector.broadcast %15 : vector<4x1xi1> to vector<4x512xi1>
    %17 = vector.broadcast %cst : f32 to vector<4x512xf32>
    %18 = arith.select %16, %14, %17 : vector<4x512xi1>, vector<4x512xf32>
    %c0_5 = arith.constant 0 : index
    %c0_6 = arith.constant 0 : index
    %19 = vector.load %arg4[%c0_5, %c0_6] : memref<4x128xi8, #tpu.memory_space<vmem>>, vector<4x128xi8>
    %20 = arith.sitofp %19 : vector<4x128xi8> to vector<4x128xf32>
    %cst_7 = arith.constant 0.000000e+00 : f32
    %21 = vector.shape_cast %10 : vector<4x1xi1> to vector<4x1xi1>
    %22 = vector.broadcast %21 : vector<4x1xi1> to vector<4x128xi1>
    %23 = vector.broadcast %cst_7 : f32 to vector<4x128xf32>
    %24 = arith.select %22, %20, %23 : vector<4x128xi1>, vector<4x128xf32>
    %25 = arith.truncf %24 : vector<4x128xf32> to vector<4x128xbf16>
    %c0_8 = arith.constant 0 : index
    %c0_9 = arith.constant 0 : index
    %26 = vector.load %arg5[%c0_8, %c0_9] : memref<128x512xbf16, #tpu.memory_space<vmem>>, vector<128x512xbf16>
    %cst_10 = arith.constant dense<0.000000e+00> : vector<4x512xf32>
    %27 = tpu.matmul %25, %26, %cst_10 {dimension_numbers = #tpu.dot_dimension_numbers<[1], [0], [0], [1], [0, 0, 1, 1], [], []>} : vector<4x128xbf16>, vector<128x512xbf16>, vector<4x512xf32> -> vector<4x512xf32>
    %c0_11 = arith.constant 0 : index
    %c0_12 = arith.constant 0 : index
    %28 = vector.load %arg8[%c0_11, %c0_12] : memref<4x512xf32, #tpu.memory_space<vmem>>, vector<4x512xf32>
    %29 = arith.mulf %18, %27 : vector<4x512xf32>
    %30 = arith.addf %28, %29 : vector<4x512xf32>
    %c0_13 = arith.constant 0 : index
    %c0_14 = arith.constant 0 : index
    %31 = vector.load %arg8[%c0_13, %c0_14] : memref<4x512xf32, #tpu.memory_space<vmem>>, vector<4x512xf32>
    tpu.vector_store %arg8[%c0_13, %c0_14], %30 {strides = array<i32>} : memref<4x512xf32, #tpu.memory_space<vmem>>, vector<4x512xf32>,
    %c0_15 = arith.constant 0 : index
    %c0_16 = arith.constant 0 : index
    %32 = vector.load %arg9[%c0_15, %c0_16] : memref<4x128xf32, #tpu.memory_space<vmem>>, vector<4x128xf32>
    %33 = arith.addf %32, %24 : vector<4x128xf32>
    %c0_17 = arith.constant 0 : index
    %c0_18 = arith.constant 0 : index
    %34 = vector.load %arg9[%c0_17, %c0_18] : memref<4x128xf32, #tpu.memory_space<vmem>>, vector<4x128xf32>
    tpu.vector_store %arg9[%c0_17, %c0_18], %33 {strides = array<i32>} : memref<4x128xf32, #tpu.memory_space<vmem>>, vector<4x128xf32>,
    %c0_i32_19 = arith.constant 0 : i32
    %35 = arith.cmpi eq, %arg1, %c0_i32_19 : i32
    %36 = arith.extui %35 : i1 to i32
    %c0_i32_20 = arith.constant 0 : i32
    %37 = arith.cmpi ne, %36, %c0_i32_20 : i32
    scf.if %37 {
      %c0_21 = arith.constant 0 : index
      %c0_22 = arith.constant 0 : index
      %38 = vector.load %arg8[%c0_21, %c0_22] : memref<4x512xf32, #tpu.memory_space<vmem>>, vector<4x512xf32>
      %cst_23 = arith.constant dense<0.000000e+00> : vector<512xf32>
      %39 = vector.multi_reduction <add>, %38, %cst_23 [0] : vector<4x512xf32> to vector<512xf32>
      %40 = vector.shape_cast %39 : vector<512xf32> to vector<1x1x512xf32>
      %c0_24 = arith.constant 0 : index
      %c0_25 = arith.constant 0 : index
      %c0_26 = arith.constant 0 : index
      %41 = vector.load %arg6[%c0_24, %c0_25, %c0_26] : memref<1x1x512xf32, #tpu.memory_space<vmem>>, vector<1x1x512xf32>
      tpu.vector_store %arg6[%c0_24, %c0_25, %c0_26], %40 {strides = array<i32>} : memref<1x1x512xf32, #tpu.memory_space<vmem>>, vector<1x1x512xf32>,
      %c0_27 = arith.constant 0 : index
      %c0_28 = arith.constant 0 : index
      %42 = vector.load %arg9[%c0_27, %c0_28] : memref<4x128xf32, #tpu.memory_space<vmem>>, vector<4x128xf32>
      %cst_29 = arith.constant dense<0.000000e+00> : vector<128xf32>
      %43 = vector.multi_reduction <add>, %42, %cst_29 [0] : vector<4x128xf32> to vector<128xf32>
      %44 = vector.shape_cast %43 : vector<128xf32> to vector<1x1x128xf32>
      %c0_30 = arith.constant 0 : index
      %c0_31 = arith.constant 0 : index
      %c0_32 = arith.constant 0 : index
      %45 = vector.load %arg7[%c0_30, %c0_31, %c0_32] : memref<1x1x128xf32, #tpu.memory_space<vmem>>, vector<1x1x128xf32>
      tpu.vector_store %arg7[%c0_30, %c0_31, %c0_32], %44 {strides = array<i32>} : memref<1x1x128xf32, #tpu.memory_space<vmem>>, vector<1x1x128xf32>,
    } else {
    }
    return
  }
  func.func @transform_0(%arg0: i32, %arg1: i32) -> (i32, i32) {
    %c1_i32 = arith.constant 1 : i32
    %0 = arith.muli %arg0, %c1_i32 : i32
    %1 = arith.addi %0, %arg1 : i32
    %c0_i32 = arith.constant 0 : i32
    %2 = arith.minsi %1, %c0_i32 : i32
    %c0_i32_0 = arith.constant 0 : i32
    %c0_i32_1 = arith.constant 0 : i32
    return %2, %c0_i32_0 : i32, i32
  }
  func.func @transform_1(%arg0: i32, %arg1: i32) -> (i32, i32) {
    %c1_i32 = arith.constant 1 : i32
    %0 = arith.muli %arg0, %c1_i32 : i32
    %1 = arith.addi %0, %arg1 : i32
    %c0_i32 = arith.constant 0 : i32
    %2 = arith.minsi %1, %c0_i32 : i32
    %c0_i32_0 = arith.constant 0 : i32
    %c0_i32_1 = arith.constant 0 : i32
    return %2, %c0_i32_0 : i32, i32
  }
  func.func @transform_2(%arg0: i32, %arg1: i32) -> (i32, i32) {
    %c1_i32 = arith.constant 1 : i32
    %0 = arith.muli %arg0, %c1_i32 : i32
    %1 = arith.addi %0, %arg1 : i32
    %c0_i32 = arith.constant 0 : i32
    %2 = arith.minsi %1, %c0_i32 : i32
    %c0_i32_0 = arith.constant 0 : i32
    %c0_i32_1 = arith.constant 0 : i32
    return %2, %c0_i32_0 : i32, i32
  }
  func.func @transform_3(%arg0: i32, %arg1: i32) -> (i32, i32) {
    %c0_i32 = arith.constant 0 : i32
    %c0_i32_0 = arith.constant 0 : i32
    %c0_i32_1 = arith.constant 0 : i32
    return %c0_i32, %c0_i32_0 : i32, i32
  }
  func.func @transform_4(%arg0: i32, %arg1: i32) -> (i32, i32, i32) {
    %c0_i32 = arith.constant 0 : i32
    %c0_i32_0 = arith.constant 0 : i32
    %c0_i32_1 = arith.constant 0 : i32
    return %arg0, %c0_i32, %c0_i32_0 : i32, i32, i32
  }
  func.func @transform_5(%arg0: i32, %arg1: i32) -> (i32, i32, i32) {
    %c0_i32 = arith.constant 0 : i32
    %c0_i32_0 = arith.constant 0 : i32
    %c0_i32_1 = arith.constant 0 : i32
    return %arg0, %c0_i32, %c0_i32_0 : i32, i32, i32
  }
}

</mosaic_0001>

<llo_original>
// kernel: tpu_custom_call.1
$region0: #{tpu_custom_call.1}
  #allocation0 [shape = 'u32[]', space=smem, size = 0x4, offset = 0x4, fixed_abs, tag = 'smem constant byte address 0x4 - core index']
  #allocation1 [shape = 'u32[72,128]{1,0:T(1,128)}', space=vmem, size = 0x9000, scoped, tag = 'internal scratch']
  #allocation2 [shape = 'f32[4,512]{1,0:T(4,128)}', space=vmem, size = 0x2000, scoped, tag = 'scratch operand']
  #allocation3 [shape = 'f32[4,128]{1,0:T(4,128)}', space=vmem, size = 0x800, scoped, tag = 'scratch operand']
  %s0 = inlined_call_operand.hbm [shape: f32[4,512], index: 0, kind: input, shape index: {}]
  %s1 = inlined_call_operand.hbm [shape: f32[4,512], index: 1, kind: input, shape index: {}]
  %s2 = inlined_call_operand.vmem [shape: s8[4,128], index: 2, kind: input, shape index: {}]
  %s3 = inlined_call_operand.hbm [shape: bf16[128,512], index: 3, kind: input, shape index: {}]
  %s4 = inlined_call_operand.hbm [shape: f32[1,1,512], index: 4, kind: output, shape index: {0}]
  %s5 = inlined_call_operand.hbm [shape: f32[1,1,128], index: 5, kind: output, shape index: {1}]
  %6 = xla_tuple %s4, %s5
  %s7 = sld [smem:[#allocation0]]
  $region54: #{tpu_custom_call.1} parent=0
    _
  %s9 = ssub.s32 1, %s7
  %s10 = scalar_select 0, %s9, %s7
  $region1: #{tpu_custom_call.1} parent=0
    #allocation4 [shape = 'u8[8192]{0}', space=vmem, size = 0x2000, scoped, tag = 'input window, operand 0, single buffered']
    #allocation5 [shape = 's32[1]{0}', space=sflag, size = 0x4, scoped, tag = 'scoped memory for tpu_custom_call.1']
    #allocation6 [shape = 's32[1]{0}', space=sflag, size = 0x4, scoped, tag = 'scoped memory for tpu_custom_call.1']
    #allocation7 [shape = 'u8[8192]{0}', space=vmem, size = 0x2000, scoped, tag = 'input window, operand 1, single buffered']
    #allocation8 [shape = 's32[1]{0}', space=sflag, size = 0x4, scoped, tag = 'scoped memory for tpu_custom_call.1']
    #allocation9 [shape = 'u8[131072]{0}', space=vmem, size = 0x20000, scoped, tag = 'input window, operand 3, single buffered']
    #allocation10 [shape = 'u8[2048]{0}', space=vmem, size = 0x800, scoped, tag = 'output window, operand 0, single buffered']
    #allocation11 [shape = 'u8[512]{0}', space=vmem, size = 0x400, scoped, tag = 'output window, operand 1, single buffered']
    #allocation12 [shape = 's32[1]{0}', space=sflag, size = 0x4, scoped, tag = 'scoped memory for tpu_custom_call.1']
    %11 = vsyncpa [#allocation5], 0
    %12 = vsyncpa [#allocation8], 0
    %13 = vsyncpa [#allocation6], 0
    %14 = vsyncpa [#allocation12], 0
    // Predicated region
    $region2: #{tpu_custom_call.1} parent=1 // pred_check
      _
    $region3: #{tpu_custom_call.1} parent=1 // pred_check_branch
      %16 = sbr.rel (0) target = $region5
    $region4: #{tpu_custom_call.1} parent=1 // pred_region
      %s17 = sadd.s32 0, 0
      %p18 = scmp.lt.s32.totalorder %s17, 0
      %s19 = scalar_select %p18, %s17, 0
      %21 = vsyncadd [#allocation5], 0
      %s22 = smul.addr %s19, 4
      %s23 = smul.addr %s22, 4
      %s24 = scalar_lea.hbm %s0, %s23
      %s26 = sshll.u32 %s24, 4
      %s27 = int_to_ptr.hbm [resolvable:$true] %s26
      %s28 = sshll.u32 [#allocation4], 4
      %s29 = int_to_ptr.vmem [resolvable:$true] %s28
      %31 = dma.hbm_to_vmem [thread:$0]  %s27, 256, %s29, [#allocation5]
    $region5: #{tpu_custom_call.1} parent=1 // pred_fallthru
      _
    // Predicated region
    $region6: #{tpu_custom_call.1} parent=1 // pred_check
      _
    $region7: #{tpu_custom_call.1} parent=1 // pred_check_branch
      %33 = sbr.rel (0) target = $region9
    $region8: #{tpu_custom_call.1} parent=1 // pred_region
      %s34 = sadd.s32 0, 0
      %p35 = scmp.lt.s32.totalorder %s34, 0
      %s36 = scalar_select %p35, %s34, 0
      %38 = vsyncadd [#allocation8], 0
      %s39 = smul.addr %s36, 4
      %s40 = smul.addr %s39, 4
      %s41 = scalar_lea.hbm %s1, %s40
      %s43 = sshll.u32 %s41, 4
      %s44 = int_to_ptr.hbm [resolvable:$true] %s43
      %s45 = sshll.u32 [#allocation7], 4
      %s46 = int_to_ptr.vmem [resolvable:$true] %s45
      %48 = dma.hbm_to_vmem [thread:$0]  %s44, 256, %s46, [#allocation8]
    $region9: #{tpu_custom_call.1} parent=1 // pred_fallthru
      _
    // Predicated region
    $region10: #{tpu_custom_call.1} parent=1 // pred_check
      _
    $region11: #{tpu_custom_call.1} parent=1 // pred_check_branch
      %50 = sbr.rel (0) target = $region13
    $region12: #{tpu_custom_call.1} parent=1 // pred_region
      %s51 = sadd.s32 0, 0
      %p52 = scmp.lt.s32.totalorder %s51, 0
      %s53 = scalar_select %p52, %s51, 0
      %p54 = scmp.lt.s32.totalorder %s53, 0
      %s55 = scalar_select %p54, %s53, 0
      %s56 = scalar_lea.vmem %s2, %s55
      %s57 = sadd.s32 0, 0
      %p58 = scmp.lt.s32.totalorder %s57, 0
      %s59 = scalar_select %p58, %s57, 0
    $region13: #{tpu_custom_call.1} parent=1 // pred_fallthru
      _
    // Predicated region
    $region14: #{tpu_custom_call.1} parent=1 // pred_check
      _
    $region15: #{tpu_custom_call.1} parent=1 // pred_check_branch
      %61 = sbr.rel (0) target = $region17
    $region16: #{tpu_custom_call.1} parent=1 // pred_region
      %63 = vsyncadd [#allocation8], 0
      %s64 = sshll.u32 %s3, 4
      %s65 = int_to_ptr.hbm [resolvable:$true] %s64
      %s66 = sshll.u32 [#allocation9], 4
      %s67 = int_to_ptr.vmem [resolvable:$true] %s66
      %72 = dma.hbm_to_vmem [thread:$0]  %s65, 4096, %s67, [#allocation8], 256, 256, 16
    $region17: #{tpu_custom_call.1} parent=1 // pred_fallthru
      _
    // Predicated region
    $region18: #{tpu_custom_call.1} parent=1 // pred_check
      _
    $region19: #{tpu_custom_call.1} parent=1 // pred_check_branch
      %74 = sbr.rel (0) target = $region21
    $region20: #{tpu_custom_call.1} parent=1 // pred_region
      %76 = dma.done [#allocation5], 256
    $region21: #{tpu_custom_call.1} parent=1 // pred_fallthru
      _
    // Predicated region
    $region22: #{tpu_custom_call.1} parent=1 // pred_check
      _
    $region23: #{tpu_custom_call.1} parent=1 // pred_check_branch
      %78 = sbr.rel (0) target = $region25
    $region24: #{tpu_custom_call.1} parent=1 // pred_region
      %80 = dma.done [#allocation8], 256
    $region25: #{tpu_custom_call.1} parent=1 // pred_fallthru
      _
    // Predicated region
    $region26: #{tpu_custom_call.1} parent=1 // pred_check
      _
    $region27: #{tpu_custom_call.1} parent=1 // pred_check_branch
      %82 = sbr.rel (0) target = $region29
    $region28: #{tpu_custom_call.1} parent=1 // pred_region
      %84 = dma.done [#allocation8], 4096
    $region29: #{tpu_custom_call.1} parent=1 // pred_fallthru
      _
    %s85 = sadd.s32 0, 0
    %p86 = scmp.lt.s32.totalorder %s85, 0
    %s87 = scalar_select %p86, %s85, 0
    %p88 = scmp.lt.s32.totalorder %s87, 0
    %s89 = scalar_select %p88, %s87, 0
    %s90 = scalar_lea.vmem %s2, %s89
    %s91 = sadd.s32 0, 0
    %p92 = scmp.lt.s32.totalorder %s91, 0
    %s93 = scalar_select %p92, %s91, 0
    %s94 = sadd.s32 0, 0
    %p95 = scmp.lt.s32.totalorder %s94, 0
    %s96 = scalar_select %p95, %s94, 0
    %s97 = sadd.s32 0, 0
    %p98 = scmp.lt.s32.totalorder %s97, 0
    %s99 = scalar_select %p98, %s97, 0
    %p100 = scmp.lt.s32.totalorder %s99, 0
    %s101 = scalar_select %p100, %s99, 0
    %s102 = scalar_lea.vmem %s2, %s101
    %s103 = sadd.s32 0, 0
    %p104 = scmp.lt.s32.totalorder %s103, 0
    %s105 = scalar_select %p104, %s103, 0
    %p106 = scmp.eq.s32.totalorder 0, 0
    // Predicated region
    $region30: #{tpu_custom_call.1} parent=1 // pred_check
      %p107 = pneg %p106
    $region31: #{tpu_custom_call.1} parent=1 // pred_check_branch
      %109 = sbr.rel (%p107) target = $region33
    $region32: #{tpu_custom_call.1} parent=1 // pred_region
      %110 = vst [vmem:[#allocation2] sm:$0xff] 0.0
      %111 = vst [vmem:[#allocation2 + $0x8] sm:$0xff] 0.0
      %112 = vst [vmem:[#allocation3] sm:$0xf] 0.0
    $region33: #{tpu_custom_call.1} parent=1 // pred_fallthru
      _
    %s113 = sadd.s32 0, 0
    %s114 = smul.u32 %s113, 4
    %v115 = vlaneseq
    %v116 = vshrl.u32 %v115, 7
    %v117 = vstv %s114
    %v118 = vadd.s32 %v117, %v116
    %vm119 = vcmp.lt.s32.totalorder %v118, 4
    %v120 = vld [vmem:[#allocation4] sm:$0xff]
    %v121 = vld [vmem:[#allocation4 + $0x8] sm:$0xff]
    %v122 = vld [vmem:[#allocation7] sm:$0xff]
    %v123 = vld [vmem:[#allocation7 + $0x8] sm:$0xff]
    %v124 = vsub.f32 %v120, %v122
    %v125 = vsub.f32 %v121, %v123
    %v126 = vand.u32 2147483647, %v124
    %v127 = vand.u32 2147483647, %v125
    %v128 = vsel %vm119, 1, 0
    %vm129 = vcmp.eq.s32.totalorder %v128, 1
    %132 = vst [vmem:[#allocation1] ss:$2 sm:$0xff] %v126
    %s133 = scalar_lea.vmem [#allocation1], 16
    %134 = vst [vmem:[%s133] ss:$2 sm:$0xff] %v127
    %v135 = vld.sshfl [vmem:[#allocation1] sm:$0xff pattern:$0x75316420]
    %v136 = vld.sshfl [vmem:[#allocation1 + $0x8] sm:$0xff pattern:$0x75316420]
    %v137 = vld.sshfl [vmem:[#allocation1 + $0x10] sm:$0xff pattern:$0x75316420]
    %v138 = vld.sshfl [vmem:[#allocation1 + $0x18] sm:$0xff pattern:$0x75316420]
    %v143 = vsel %vm129, %v135, 0.0
    %v144 = vsel %vm129, %v136, 0.0
    %v145 = vsel %vm129, %v137, 0.0
    %v146 = vsel %vm129, %v138, 0.0
    %v147 = vld [vmem:[%s102] sm:$0x1]
    %v148 = vunpack.c.0.s8 %v147
    %v149 = vcvt.s32.f32 %v148
    %v150 = vsel %vm129, %v149, 0.0
    %v151 = vpack.c.bf16 %v150, %v150
    %v152 = vld [vmem:[#allocation9] sm:$0xff]
    %v153 = vld [vmem:[#allocation9 + $0x8] sm:$0xff]
    %v154 = vld [vmem:[#allocation9 + $0x10] sm:$0xff]
    %v155 = vld [vmem:[#allocation9 + $0x18] sm:$0xff]
    %v156 = vld [vmem:[#allocation9 + $0x20] sm:$0xff]
    %v157 = vld [vmem:[#allocation9 + $0x28] sm:$0xff]
    %v158 = vld [vmem:[#allocation9 + $0x30] sm:$0xff]
    %v159 = vld [vmem:[#allocation9 + $0x38] sm:$0xff]
    %v160 = vld [vmem:[#allocation9 + $0x40] sm:$0xff]
    %v161 = vld [vmem:[#allocation9 + $0x48] sm:$0xff]
    %v162 = vld [vmem:[#allocation9 + $0x50] sm:$0xff]
    %v163 = vld [vmem:[#allocation9 + $0x58] sm:$0xff]
    %v164 = vld [vmem:[#allocation9 + $0x60] sm:$0xff]
    %v165 = vld [vmem:[#allocation9 + $0x68] sm:$0xff]
    %v166 = vld [vmem:[#allocation9 + $0x70] sm:$0xff]
    %v167 = vld [vmem:[#allocation9 + $0x78] sm:$0xff]
    %v168 = vld [vmem:[#allocation9 + $0x80] sm:$0xff]
    %v169 = vld [vmem:[#allocation9 + $0x88] sm:$0xff]
    %v170 = vld [vmem:[#allocation9 + $0x90] sm:$0xff]
    %v171 = vld [vmem:[#allocation9 + $0x98] sm:$0xff]
    %v172 = vld [vmem:[#allocation9 + $0xa0] sm:$0xff]
    %v173 = vld [vmem:[#allocation9 + $0xa8] sm:$0xff]
    %v174 = vld [vmem:[#allocation9 + $0xb0] sm:$0xff]
    %v175 = vld [vmem:[#allocation9 + $0xb8] sm:$0xff]
    %v176 = vld [vmem:[#allocation9 + $0xc0] sm:$0xff]
    %v177 = vld [vmem:[#allocation9 + $0xc8] sm:$0xff]
    %v178 = vld [vmem:[#allocation9 + $0xd0] sm:$0xff]
    %v179 = vld [vmem:[#allocation9 + $0xd8] sm:$0xff]
    %v180 = vld [vmem:[#allocation9 + $0xe0] sm:$0xff]
    %v181 = vld [vmem:[#allocation9 + $0xe8] sm:$0xff]
    %v182 = vld [vmem:[#allocation9 + $0xf0] sm:$0xff]
    %v183 = vld [vmem:[#allocation9 + $0xf8] sm:$0xff]
    %v216 = vunpack.c.l.b16 %v152
    %v217 = vunpack.c.h.b16 %v152
    %v218 = vunpack.c.l.b16 %v153
    %v219 = vunpack.c.h.b16 %v153
    %v220 = vunpack.c.l.b16 %v154
    %v221 = vunpack.c.h.b16 %v154
    %v222 = vunpack.c.l.b16 %v155
    %v223 = vunpack.c.h.b16 %v155
    %v224 = vunpack.c.l.b16 %v156
    %v225 = vunpack.c.h.b16 %v156
    %v226 = vunpack.c.l.b16 %v157
    %v227 = vunpack.c.h.b16 %v157
    %v228 = vunpack.c.l.b16 %v158
    %v229 = vunpack.c.h.b16 %v158
    %v230 = vunpack.c.l.b16 %v159
    %v231 = vunpack.c.h.b16 %v159
    %v232 = vunpack.c.l.b16 %v160
    %v233 = vunpack.c.h.b16 %v160
    %v234 = vunpack.c.l.b16 %v161
    %v235 = vunpack.c.h.b16 %v161
    %v236 = vunpack.c.l.b16 %v162
    %v237 = vunpack.c.h.b16 %v162
    %v238 = vunpack.c.l.b16 %v163
    %v239 = vunpack.c.h.b16 %v163
    %v240 = vunpack.c.l.b16 %v164
    %v241 = vunpack.c.h.b16 %v164
    %v242 = vunpack.c.l.b16 %v165
    %v243 = vunpack.c.h.b16 %v165
    %v244 = vunpack.c.l.b16 %v166
    %v245 = vunpack.c.h.b16 %v166
    %v246 = vunpack.c.l.b16 %v167
    %v247 = vunpack.c.h.b16 %v167
    %v248 = vunpack.c.l.b16 %v168
    %v249 = vunpack.c.h.b16 %v168
    %v250 = vunpack.c.l.b16 %v169
    %v251 = vunpack.c.h.b16 %v169
    %v252 = vunpack.c.l.b16 %v170
    %v253 = vunpack.c.h.b16 %v170
    %v254 = vunpack.c.l.b16 %v171
    %v255 = vunpack.c.h.b16 %v171
    %v256 = vunpack.c.l.b16 %v172
    %v257 = vunpack.c.h.b16 %v172
    %v258 = vunpack.c.l.b16 %v173
    %v259 = vunpack.c.h.b16 %v173
    %v260 = vunpack.c.l.b16 %v174
    %v261 = vunpack.c.h.b16 %v174
    %v262 = vunpack.c.l.b16 %v175
    %v263 = vunpack.c.h.b16 %v175
    %v264 = vunpack.c.l.b16 %v176
    %v265 = vunpack.c.h.b16 %v176
    %v266 = vunpack.c.l.b16 %v177
    %v267 = vunpack.c.h.b16 %v177
    %v268 = vunpack.c.l.b16 %v178
    %v269 = vunpack.c.h.b16 %v178
    %v270 = vunpack.c.l.b16 %v179
    %v271 = vunpack.c.h.b16 %v179
    %v272 = vunpack.c.l.b16 %v180
    %v273 = vunpack.c.h.b16 %v180
    %v274 = vunpack.c.l.b16 %v181
    %v275 = vunpack.c.h.b16 %v181
    %v276 = vunpack.c.l.b16 %v182
    %v277 = vunpack.c.h.b16 %v182
    %v278 = vunpack.c.l.b16 %v183
    %v279 = vunpack.c.h.b16 %v183
    %v280 = vpack.c.b16 %v220, %v216
    %v281 = vpack.c.b16 %v221, %v217
    %v282 = vpack.c.b16 %v222, %v218
    %v283 = vpack.c.b16 %v223, %v219
    %v284 = vpack.c.b16 %v228, %v224
    %v285 = vpack.c.b16 %v229, %v225
    %v286 = vpack.c.b16 %v230, %v226
    %v287 = vpack.c.b16 %v231, %v227
    %v288 = vpack.c.b16 %v236, %v232
    %v289 = vpack.c.b16 %v237, %v233
    %v290 = vpack.c.b16 %v238, %v234
    %v291 = vpack.c.b16 %v239, %v235
    %v292 = vpack.c.b16 %v244, %v240
    %v293 = vpack.c.b16 %v245, %v241
    %v294 = vpack.c.b16 %v246, %v242
    %v295 = vpack.c.b16 %v247, %v243
    %v296 = vpack.c.b16 %v252, %v248
    %v297 = vpack.c.b16 %v253, %v249
    %v298 = vpack.c.b16 %v254, %v250
    %v299 = vpack.c.b16 %v255, %v251
    %v300 = vpack.c.b16 %v260, %v256
    %v301 = vpack.c.b16 %v261, %v257
    %v302 = vpack.c.b16 %v262, %v258
    %v303 = vpack.c.b16 %v263, %v259
    %v304 = vpack.c.b16 %v268, %v264
    %v305 = vpack.c.b16 %v269, %v265
    %v306 = vpack.c.b16 %v270, %v266
    %v307 = vpack.c.b16 %v271, %v267
    %v308 = vpack.c.b16 %v276, %v272
    %v309 = vpack.c.b16 %v277, %v273
    %v310 = vpack.c.b16 %v278, %v274
    %v311 = vpack.c.b16 %v279, %v275
    %344 = vmatpush.bf16.msra.mxu0 %v308
    %345 = vmatpush.bf16.msra.mxu0 %v304
    %346 = vmatpush.bf16.msra.mxu0 %v300
    %347 = vmatpush.bf16.msra.mxu0 %v296
    %348 = vmatpush.bf16.msra.mxu0 %v292
    %349 = vmatpush.bf16.msra.mxu0 %v288
    %350 = vmatpush.bf16.msra.mxu0 %v284
    %351 = vmatpush.bf16.msra.mxu0 %v280
    %352 = vmatmul.bf16.gmra.mxu0 %v151
    %v353 = vpop.f32.mrf.mxu0
    %v354 = vadd.f32 0.0, %v353
    %v355 = vpop.f32.mrf.mxu0
    %356 = vdwg.mxu0
    %357 = vmatpush.bf16.msra.mxu0 %v309
    %358 = vmatpush.bf16.msra.mxu0 %v305
    %359 = vmatpush.bf16.msra.mxu0 %v301
    %360 = vmatpush.bf16.msra.mxu0 %v297
    %361 = vmatpush.bf16.msra.mxu0 %v293
    %362 = vmatpush.bf16.msra.mxu0 %v289
    %363 = vmatpush.bf16.msra.mxu0 %v285
    %364 = vmatpush.bf16.msra.mxu0 %v281
    %365 = vmatmul.bf16.gmra.mxu0 %v151
    %v366 = vpop.f32.mrf.mxu0
    %v367 = vadd.f32 0.0, %v366
    %v368 = vpop.f32.mrf.mxu0
    %369 = vdwg.mxu0
    %370 = vmatpush.bf16.msra.mxu0 %v310
    %371 = vmatpush.bf16.msra.mxu0 %v306
    %372 = vmatpush.bf16.msra.mxu0 %v302
    %373 = vmatpush.bf16.msra.mxu0 %v298
    %374 = vmatpush.bf16.msra.mxu0 %v294
    %375 = vmatpush.bf16.msra.mxu0 %v290
    %376 = vmatpush.bf16.msra.mxu0 %v286
    %377 = vmatpush.bf16.msra.mxu0 %v282
    %378 = vmatmul.bf16.gmra.mxu0 %v151
    %v379 = vpop.f32.mrf.mxu0
    %v380 = vadd.f32 0.0, %v379
    %v381 = vpop.f32.mrf.mxu0
    %382 = vdwg.mxu0
    %383 = vmatpush.bf16.msra.mxu0 %v311
    %384 = vmatpush.bf16.msra.mxu0 %v307
    %385 = vmatpush.bf16.msra.mxu0 %v303
    %386 = vmatpush.bf16.msra.mxu0 %v299
    %387 = vmatpush.bf16.msra.mxu0 %v295
    %388 = vmatpush.bf16.msra.mxu0 %v291
    %389 = vmatpush.bf16.msra.mxu0 %v287
    %390 = vmatpush.bf16.msra.mxu0 %v283
    %391 = vmatmul.bf16.gmra.mxu0 %v151
    %v392 = vpop.f32.mrf.mxu0
    %v393 = vadd.f32 0.0, %v392
    %v394 = vpop.f32.mrf.mxu0
    %395 = vdwg.mxu0
    %v396 = vld [vmem:[#allocation2] sm:$0xff]
    %v397 = vld [vmem:[#allocation2 + $0x8] sm:$0xff]
    %v398 = vmul.f32 %v143, %v354
    %v399 = vmul.f32 %v144, %v367
    %v400 = vmul.f32 %v145, %v380
    %v401 = vmul.f32 %v146, %v393
    %v406 = vrot.slane %v399, 4
    %v407 = vrot.slane %v401, 4
    %vm408 = vcmask 1043456
    %v409 = vsel %vm408, %v398, %v406
    %v410 = vsel %vm408, %v400, %v407
    %v413 = vadd.f32 %v396, %v409
    %v414 = vadd.f32 %v397, %v410
    %415 = vst [vmem:[#allocation2] sm:$0xff] %v413
    %416 = vst [vmem:[#allocation2 + $0x8] sm:$0xff] %v414
    %v417 = vld [vmem:[#allocation3] sm:$0xf]
    %v418 = vadd.f32 %v417, %v150
    %419 = vst [vmem:[#allocation3] sm:$0xf] %v418
    // Predicated region
    $region34: #{tpu_custom_call.1} parent=1 // pred_check
      %p420 = pneg %p106
    $region35: #{tpu_custom_call.1} parent=1 // pred_check_branch
      %422 = sbr.rel (%p420) target = $region37
    $region36: #{tpu_custom_call.1} parent=1 // pred_region
      %v423 = vld [vmem:[#allocation2] sm:$0xff]
      %v424 = vld [vmem:[#allocation2 + $0x8] sm:$0xff]
      %427 = vst [vmem:[#allocation1] ss:$2 sm:$0xff] %v423
      %s428 = scalar_lea.vmem [#allocation1], 16
      %429 = vst [vmem:[%s428] ss:$2 sm:$0xff] %v424
      %v430 = vld.sshfl [vmem:[#allocation1] sm:$0xff pattern:$0x75316420]
      %v431 = vld.sshfl [vmem:[#allocation1 + $0x8] sm:$0xff pattern:$0x75316420]
      %v432 = vld.sshfl [vmem:[#allocation1 + $0x10] sm:$0xff pattern:$0x75316420]
      %v433 = vld.sshfl [vmem:[#allocation1 + $0x18] sm:$0xff pattern:$0x75316420]
      %v438 = vsel %vm408, %v430, 0.0
      %v439 = vrot.slane %v438, 4
      %v440 = vadd.f32 %v438, %v439
      %v441 = vrot.slane %v440, 2
      %v442 = vadd.f32 %v440, %v441
      %v443 = vrot.slane %v442, 1
      %v444 = vadd.f32 %v442, %v443
      %v445 = vsel %vm408, %v431, 0.0
      %v446 = vrot.slane %v445, 4
      %v447 = vadd.f32 %v445, %v446
      %v448 = vrot.slane %v447, 2
      %v449 = vadd.f32 %v447, %v448
      %v450 = vrot.slane %v449, 1
      %v451 = vadd.f32 %v449, %v450
      %v452 = vsel %vm408, %v432, 0.0
      %v453 = vrot.slane %v452, 4
      %v454 = vadd.f32 %v452, %v453
      %v455 = vrot.slane %v454, 2
      %v456 = vadd.f32 %v454, %v455
      %v457 = vrot.slane %v456, 1
      %v458 = vadd.f32 %v456, %v457
      %v459 = vsel %vm408, %v433, 0.0
      %v460 = vrot.slane %v459, 4
      %v461 = vadd.f32 %v459, %v460
      %v462 = vrot.slane %v461, 2
      %v463 = vadd.f32 %v461, %v462
      %v464 = vrot.slane %v463, 1
      %v465 = vadd.f32 %v463, %v464
      %v470 = vrot.slane %v451, 7
      %v471 = vrot.slane %v458, 6
      %v472 = vrot.slane %v465, 5
      %vm473 = vcmask 1040384
      %v474 = vsel %vm473, %v444, %v470
      %vm475 = vcmask 1042434
      %v476 = vsel %vm475, %v471, %v472
      %vm477 = vcmask 1041408
      %v478 = vsel %vm477, %v474, %v476
      %v480 = vlaneseq
      %vm481 = vcmp.ge.s32.totalorder %v480, 0
      %vm482 = vcmp.lt.s32.totalorder %v480, 512
      %vm483 = vmand %vm481, %vm482
      %484 = vst.msk [vmem:[#allocation10] sm:$0xf] %vm483, %v478
      %v485 = vld [vmem:[#allocation3] sm:$0xf]
      %v486 = vsel %vm408, %v485, 0.0
      %v487 = vrot.slane %v486, 4
      %v488 = vadd.f32 %v486, %v487
      %v489 = vrot.slane %v488, 2
      %v490 = vadd.f32 %v488, %v489
      %v491 = vrot.slane %v490, 1
      %v492 = vadd.f32 %v490, %v491
      %493 = vst [vmem:[#allocation11] sm:$0x1] %v492
    $region37: #{tpu_custom_call.1} parent=1 // pred_fallthru
      _
    // Predicated region
    $region38: #{tpu_custom_call.1} parent=1 // pred_check
      _
    $region39: #{tpu_custom_call.1} parent=1 // pred_check_branch
      %495 = sbr.rel (0) target = $region41
    $region40: #{tpu_custom_call.1} parent=1 // pred_region
      %497 = vsyncadd [#allocation6], 0
      %s499 = sshll.u32 [#allocation10], 4
      %s500 = int_to_ptr.vmem [resolvable:$true] %s499
      %s501 = sshll.u32 %s4, 4
      %s502 = int_to_ptr.hbm [resolvable:$true] %s501
      %504 = dma.vmem_to_hbm [thread:$0]  %s500, 64, %s502, [#allocation6]
    $region41: #{tpu_custom_call.1} parent=1 // pred_fallthru
      _
    // Predicated region
    $region42: #{tpu_custom_call.1} parent=1 // pred_check
      _
    $region43: #{tpu_custom_call.1} parent=1 // pred_check_branch
      %506 = sbr.rel (0) target = $region45
    $region44: #{tpu_custom_call.1} parent=1 // pred_region
      %508 = vsyncadd [#allocation12], 0
      %s510 = sshll.u32 [#allocation11], 4
      %s511 = int_to_ptr.vmem [resolvable:$true] %s510
      %s512 = sshll.u32 %s5, 4
      %s513 = int_to_ptr.hbm [resolvable:$true] %s512
      %515 = dma.vmem_to_hbm [thread:$0]  %s511, 16, %s513, [#allocation12]
    $region45: #{tpu_custom_call.1} parent=1 // pred_fallthru
      _
    // Predicated region
    $region46: #{tpu_custom_call.1} parent=1 // pred_check
      _
    $region47: #{tpu_custom_call.1} parent=1 // pred_check_branch
      %517 = sbr.rel (0) target = $region49
    $region48: #{tpu_custom_call.1} parent=1 // pred_region
      %519 = dma.done [#allocation6], 64
    $region49: #{tpu_custom_call.1} parent=1 // pred_fallthru
      _
    // Predicated region
    $region50: #{tpu_custom_call.1} parent=1 // pred_check
      _
    $region51: #{tpu_custom_call.1} parent=1 // pred_check_branch
      %521 = sbr.rel (0) target = $region53
    $region52: #{tpu_custom_call.1} parent=1 // pred_region
      %523 = dma.done [#allocation12], 16
    $region53: #{tpu_custom_call.1} parent=1 // pred_fallthru
      _
    %524 = vsyncpa [#allocation5], 1
    %525 = vsyncpa [#allocation8], 1
    %526 = vsyncpa [#allocation6], 1
    %527 = vsyncpa [#allocation12], 1

</llo_original>
